<compile_context>
chip_gen: v5e
topology: v5e:2x2
jax: 0.10.0
libtpu: 0.0.40
codegen_flags: <defaults>
</compile_context>

<pallas_src>
import jax
import jax.numpy as jnp
from jax.experimental import pallas as pl
from jax.experimental.pallas import tpu as pltpu

# Logical (PyTorch) dims implied by the module / x_test = [[4.0]]
IN_FEATURES = 1
OUT_FEATURES = 1


def linear_kernel(x_ref, wb_ref, o_ref):
    # x_ref: (batch, 1) f32 in VMEM (whole-array block, unpadded).
    # wb_ref: (1, 2) f32 in SMEM -> [w, b] packed scalars.
    # o_ref: (batch, 1) f32 in VMEM (logical output shape, masked store).
    w = wb_ref[0, 0]
    b = wb_ref[0, 1]
    o_ref[...] = x_ref[...] * w + b  # single VPU FMA


def pack_params(weight, bias):
    """One-time param prep: pack W (1,1) and b (1,) into a single (1,2) SMEM scalar operand."""
    assert weight.shape == (OUT_FEATURES, IN_FEATURES) and bias.shape == (OUT_FEATURES,)
    assert IN_FEATURES == 1 and OUT_FEATURES == 1, "kernel assumes a 1x1 linear (no K reduction)"
    return jnp.concatenate(
        [weight.reshape(1, 1), bias.reshape(1, 1)], axis=1
    ).astype(jnp.float32)


@jax.jit
def linear_forward(x, wb):
    """x: (batch, 1) f32; wb: (1, 2) packed [weight, bias]. Returns (batch, 1)."""
    batch, in_features = x.shape
    assert in_features == IN_FEATURES == 1

    return pl.pallas_call(
        linear_kernel,
        out_shape=jax.ShapeDtypeStruct((batch, OUT_FEATURES), jnp.float32),
        in_specs=[
            pl.BlockSpec(memory_space=pltpu.MemorySpace.VMEM),  # x, whole array
            pl.BlockSpec(memory_space=pltpu.MemorySpace.SMEM),  # packed [w, b]
        ],
        out_specs=pl.BlockSpec(memory_space=pltpu.MemorySpace.VMEM),
    )(x.astype(jnp.float32), wb)


if __name__ == "__main__":
    key = jax.random.PRNGKey(0)
    k_w, k_b = jax.random.split(key)

    # Deterministic parameter init (PyTorch Linear default: U(-1/sqrt(in), 1/sqrt(in)))
    bound = 1.0 / (IN_FEATURES ** 0.5)
    weight = jax.random.uniform(
        k_w, (OUT_FEATURES, IN_FEATURES), jnp.float32, -bound, bound
    )
    bias = jax.random.uniform(k_b, (OUT_FEATURES,), jnp.float32, -bound, bound)

    wb = pack_params(weight, bias)  # done once, outside the forward pass

    # x_test = [[4.0]] as in the reference usage
    x = jnp.array([[4.0]], dtype=jnp.float32)

    y_hat = linear_forward(x, wb)
    jax.block_until_ready(y_hat)

    # Cross-check against plain JAX reference (y = x @ W^T + b)
    y_ref = x @ weight.T + bias
    assert y_hat.shape == (1, 1)
    assert jnp.allclose(y_hat, y_ref, atol=1e-5), (y_hat, y_ref)

    print("KERNEL_OK")
</pallas_src>

<mosaic_0001>
module attributes {stable_mosaic.version = 11 : i64} {
  func.func @linear_kernel(%arg0: memref<1x1xf32, #tpu.memory_space<vmem>>, %arg1: memref<1x2xf32, #tpu.memory_space<smem>>, %arg2: memref<1x1xf32, #tpu.memory_space<vmem>>) attributes {dimension_semantics = [], scalar_prefetch = 0 : i64, scratch_operands = 0 : i64, tpu.core_type = #tpu.core_type<tc>} {
    %c0 = arith.constant 0 : index
    %c0_0 = arith.constant 0 : index
    %0 = memref.load %arg1[%c0, %c0_0] : memref<1x2xf32, #tpu.memory_space<smem>>
    %c0_1 = arith.constant 0 : index
    %c1 = arith.constant 1 : index
    %1 = memref.load %arg1[%c0_1, %c1] : memref<1x2xf32, #tpu.memory_space<smem>>
    %c0_2 = arith.constant 0 : index
    %c0_3 = arith.constant 0 : index
    %2 = vector.load %arg0[%c0_2, %c0_3] : memref<1x1xf32, #tpu.memory_space<vmem>>, vector<1x1xf32>
    %3 = vector.broadcast %0 : f32 to vector<1x1xf32>
    %4 = arith.mulf %2, %3 : vector<1x1xf32>
    %5 = vector.broadcast %1 : f32 to vector<1x1xf32>
    %6 = arith.addf %4, %5 : vector<1x1xf32>
    %c0_4 = arith.constant 0 : index
    %c0_5 = arith.constant 0 : index
    %7 = vector.load %arg2[%c0_4, %c0_5] : memref<1x1xf32, #tpu.memory_space<vmem>>, vector<1x1xf32>
    tpu.vector_store %arg2[%c0_4, %c0_5], %6 {strides = array<i32>} : memref<1x1xf32, #tpu.memory_space<vmem>>, vector<1x1xf32>,
    return
  }
}

</mosaic_0001>

<llo_original>
// kernel: linear_forward.1
$region0: #{linear_forward.1}
  #allocation0 [shape = 'u32[]', space=smem, size = 0x4, offset = 0x4, fixed_abs, tag = 'smem constant byte address 0x4 - core index']
  #allocation1 [shape = 'u32[72,128]{1,0:T(1,128)}', space=vmem, size = 0x9000, scoped, tag = 'internal scratch']
  #allocation2 [shape = 'f32[1,1]{1,0:T(1,128)S(1)}', space=vmem, size = 0x200, scoped, tag = 'scoped memory for linear_forward.1']
  %s0 = inlined_call_operand.<no memory space> [shape: f32[1,1], index: 0, kind: input, shape index: {}]
  %s1 = inlined_call_operand.vmem [shape: f32[1,2], index: 1, kind: input, shape index: {}]
  %s2 = inlined_call_operand.hbm [shape: f32[1,1], index: 2, kind: output, shape index: {}]
  %s3 = sld [smem:[#allocation0]]
  $region22: #{linear_forward.1} parent=0
    _
  %s5 = ssub.s32 1, %s3
  %s6 = scalar_select 0, %s5, %s3
  %v7 = vstv %s0
  %8 = vst [vmem:[#allocation2] sm:$0x1] %v7
  $region1: #{linear_forward.1} parent=0
    #allocation3 [shape = 'u8[512]{0}', space=smem, size = 0x200, scoped, tag = 'input window, operand 1, single buffered']
    #allocation4 [shape = 's32[1]{0}', space=sflag, size = 0x4, scoped, tag = 'scoped memory for linear_forward.1']
    #allocation5 [shape = 's32[1]{0}', space=sflag, size = 0x4, scoped, tag = 'scoped memory for linear_forward.1']
    #allocation6 [shape = 'u8[512]{0}', space=vmem, size = 0x400, scoped, tag = 'output window, operand 0, single buffered']
    %9 = vsyncpa [#allocation5], 0
    %10 = vsyncpa [#allocation4], 0
    // Predicated region
    $region2: #{linear_forward.1} parent=1 // pred_check
      _
    $region3: #{linear_forward.1} parent=1 // pred_check_branch
      %12 = sbr.rel (0) target = $region5
    $region4: #{linear_forward.1} parent=1 // pred_region
      _
    $region5: #{linear_forward.1} parent=1 // pred_fallthru
      _
    // Predicated region
    $region6: #{linear_forward.1} parent=1 // pred_check
      _
    $region7: #{linear_forward.1} parent=1 // pred_check_branch
      %14 = sbr.rel (0) target = $region9
    $region8: #{linear_forward.1} parent=1 // pred_region
      %16 = vsyncadd [#allocation5], 0
      %s18 = sshll.u32 %s1, 4
      %s19 = int_to_ptr.vmem [resolvable:$true] %s18
      %21 = dma.vmem_to_smem %s19, 16, [#allocation3], [#allocation5]
    $region9: #{linear_forward.1} parent=1 // pred_fallthru
      _
    // Predicated region
    $region10: #{linear_forward.1} parent=1 // pred_check
      _
    $region11: #{linear_forward.1} parent=1 // pred_check_branch
      %23 = sbr.rel (0) target = $region13
    $region12: #{linear_forward.1} parent=1 // pred_region
      %25 = dma.done [#allocation5], 16
    $region13: #{linear_forward.1} parent=1 // pred_fallthru
      _
    %26 = sfence
    %s27 = sld [smem:[#allocation3]]
    %s28 = sld [smem:[#allocation3 + $0x1]]
    %v29 = vld [vmem:[#allocation2] sm:$0x1]
    %v30 = vstv %s27
    %v31 = vmul.f32 %v29, %v30
    %v32 = vstv %s28
    %v33 = vadd.f32 %v31, %v32
    %vm34 = vcmask 0
    %35 = vst.msk [vmem:[#allocation6] sm:$0x1] %vm34, %v33
    // Predicated region
    $region14: #{linear_forward.1} parent=1 // pred_check
      _
    $region15: #{linear_forward.1} parent=1 // pred_check_branch
      %37 = sbr.rel (0) target = $region17
    $region16: #{linear_forward.1} parent=1 // pred_region
      %39 = vsyncadd [#allocation4], 0
      %s41 = sshll.u32 [#allocation6], 4
      %s42 = int_to_ptr.vmem [resolvable:$true] %s41
      %s43 = sshll.u32 %s2, 4
      %s44 = int_to_ptr.hbm [resolvable:$true] %s43
      %46 = dma.vmem_to_hbm [thread:$0]  %s42, 16, %s44, [#allocation4]
    $region17: #{linear_forward.1} parent=1 // pred_fallthru
      _
    // Predicated region
    $region18: #{linear_forward.1} parent=1 // pred_check
      _
    $region19: #{linear_forward.1} parent=1 // pred_check_branch
      %48 = sbr.rel (0) target = $region21
    $region20: #{linear_forward.1} parent=1 // pred_region
      %50 = dma.done [#allocation4], 16
    $region21: #{linear_forward.1} parent=1 // pred_fallthru
      _
    %51 = vsyncpa [#allocation4], 1
    %52 = vsyncpa [#allocation5], 1

</llo_original>
